<compile_context>
chip_gen: v7x
topology: tpu7x:2x2x1
jax: 0.10.0
libtpu: 0.0.40
codegen_flags: <defaults>
</compile_context>

<pallas_src>
import functools

import jax
import jax.numpy as jnp
from jax.experimental import pallas as pl
from jax.experimental.pallas import tpu as pltpu


def _make_positional_table(num_hiddens: int, max_len: int) -> jnp.ndarray:
    """Build P of shape (1, max_len, num_hiddens) exactly like the torch init."""
    pos = jnp.arange(max_len, dtype=jnp.float32).reshape(-1, 1)
    div = jnp.power(
        10000.0,
        jnp.arange(0, num_hiddens, 2, dtype=jnp.float32) / num_hiddens,
    )
    x = pos / div  # (max_len, ceil(num_hiddens/2))
    P = jnp.zeros((max_len, num_hiddens), dtype=jnp.float32)
    P = P.at[:, 0::2].set(jnp.sin(x))
    P = P.at[:, 1::2].set(jnp.cos(x[:, : num_hiddens // 2]))
    return P[None, :, :]  # (1, max_len, num_hiddens)


def _fmix32(x):
    """murmur3-style 32-bit finalizer (bijective mixer) on uint32 values."""
    x = x ^ (x >> jnp.uint32(16))
    x = x * jnp.uint32(0x7FEB352D)
    x = x ^ (x >> jnp.uint32(15))
    x = x * jnp.uint32(0x846CA68B)
    x = x ^ (x >> jnp.uint32(16))
    return x


def _pe_dropout_kernel(seed_ref, x_ref, p_ref, o_ref, *, dropout_p, train, total_w):
    # x_ref: (TB, TW) tile of the flattened (B, S*H) input
    # p_ref: (1, TW)  tile of the flattened positional table (broadcast over rows)
    y = x_ref[...] + p_ref[...]

    if train and dropout_p > 0.0:
        tb, tw = x_ref.shape
        i = pl.program_id(0)
        j = pl.program_id(1)
        rows = jax.lax.broadcasted_iota(jnp.uint32, (tb, tw), 0) + (i * tb).astype(jnp.uint32)
        cols = jax.lax.broadcasted_iota(jnp.uint32, (tb, tw), 1) + (j * tw).astype(jnp.uint32)
        idx = rows * jnp.uint32(total_w) + cols  # global element counter
        key = _fmix32(seed_ref[0].astype(jnp.uint32))
        bits = _fmix32(idx * jnp.uint32(0x9E3779B9) ^ key)
        # keep-prob = 1 - p via raw uint32 threshold compare (no float convert).
        thresh = jnp.uint32(min(int(round(dropout_p * (2.0 ** 32))), 2 ** 32 - 1))
        keep = bits >= thresh
        scale = jnp.asarray(1.0 / (1.0 - dropout_p), y.dtype)
        y = jnp.where(keep, y * scale, jnp.zeros_like(y))

    o_ref[...] = y.astype(o_ref.dtype)


def _choose_block(B, W, itemsize, target_bytes=2 << 20):
    """Pick a (TB, TW) block: lane dim multiple of 128 (or full W), ~2 MiB/buffer."""
    if W % 128 != 0 or W * itemsize <= target_bytes:
        tw = W  # full extent (required if not 128-aligned; cheap if small)
    else:
        tw = min(W, max(128, (target_bytes // (8 * itemsize)) // 128 * 128))
    rows_budget = max(1, target_bytes // max(1, tw * itemsize))
    if B <= rows_budget:
        tb = B            # full extent (always legal)
    else:
        tb = max(8, (rows_budget // 8) * 8)  # multiple of 8
    return tb, tw


def positional_encoding(x, P, *, dropout_p=0.0, train=False, seed=0):
    """x: (B, S, H); P: (1, max_len, H). Returns dropout(x + P[:, :S, :])."""
    B, S, H = x.shape
    W = S * H

    # Lane-dense flattened views; cast P once to the input dtype.
    x2 = x.reshape(B, W)
    p2 = P[:, :S, :].astype(x.dtype).reshape(1, W)
    seed_arr = jnp.array([seed], dtype=jnp.int32)

    tb, tw = _choose_block(B, W, x.dtype.itemsize)
    grid = (pl.cdiv(B, tb), pl.cdiv(W, tw))

    kernel = functools.partial(
        _pe_dropout_kernel, dropout_p=float(dropout_p), train=bool(train), total_w=W
    )

    bytes_accessed = 2 * B * W * x.dtype.itemsize + W * x.dtype.itemsize
    cost = pl.CostEstimate(
        flops=B * W * (3 if (train and dropout_p > 0.0) else 1),
        transcendentals=0,
        bytes_accessed=bytes_accessed,
    )

    out2 = pl.pallas_call(
        kernel,
        out_shape=jax.ShapeDtypeStruct((B, W), x.dtype),
        grid_spec=pltpu.PrefetchScalarGridSpec(
            num_scalar_prefetch=1,  # seed lands in SMEM
            grid=grid,
            in_specs=[
                pl.BlockSpec((tb, tw), lambda i, j, seed: (i, j)),  # x
                pl.BlockSpec((1, tw), lambda i, j, seed: (0, j)),   # P (row-broadcast)
            ],
            out_specs=pl.BlockSpec((tb, tw), lambda i, j, seed: (i, j)),
        ),
        compiler_params=pltpu.CompilerParams(
            dimension_semantics=("parallel", "parallel"),  # stateless RNG -> order-free
        ),
        cost_estimate=cost,
    )(seed_arr, x2, p2)

    return out2.reshape(B, S, H)


if __name__ == "__main__":
    # Small shapes consistent with the module: batch=2, seq=8, hidden=32
    B, S, H = 2, 8, 32
    max_len = 1000
    dropout_p = 0.1

    key = jax.random.PRNGKey(0)
    x = jax.random.normal(key, (B, S, H), dtype=jnp.float32)

    P = _make_positional_table(H, max_len)
    ref = x + P[:, :S, :]

    # Eval-mode pass (dropout is identity) — verifiable against pure JAX.
    y_eval = positional_encoding(x, P, dropout_p=dropout_p, train=False)
    y_eval = jax.block_until_ready(y_eval)
    assert jnp.allclose(y_eval, ref, atol=1e-6, rtol=1e-6), "eval-mode mismatch"

    # Train-mode pass (dropout via portable counter-based hash, deterministic per seed).
    y_train = positional_encoding(x, P, dropout_p=dropout_p, train=True, seed=1234)
    y_train = jax.block_until_ready(y_train)
    assert y_train.shape == (B, S, H)
    kept = y_train != 0
    scaled_ref = ref / (1.0 - dropout_p)
    assert jnp.allclose(
        jnp.where(kept, y_train, 0.0), jnp.where(kept, scaled_ref, 0.0),
        atol=1e-5, rtol=1e-5,
    ), "train-mode kept-element mismatch"

    print("KERNEL_OK")
</pallas_src>

<mosaic_0001>
module attributes {stable_mosaic.version = 11 : i64} {
  func.func @_pe_dropout_kernel(%arg0: i32, %arg1: i32, %arg2: memref<1xi32, #tpu.memory_space<smem>>, %arg3: memref<2x256xf32, #tpu.memory_space<vmem>>, %arg4: memref<1x256xf32, #tpu.memory_space<vmem>>, %arg5: memref<2x256xf32, #tpu.memory_space<vmem>>) attributes {dimension_semantics = [#tpu.dimension_semantics<parallel>, #tpu.dimension_semantics<parallel>], iteration_bounds = array<i64: 1, 1>, scalar_prefetch = 1 : i64, scratch_operands = 0 : i64, tpu.core_type = #tpu.core_type<tc>, window_params = [{transform_indices = @transform_0, window_bounds = array<i64: 2, 256>}, {transform_indices = @transform_1, window_bounds = array<i64: 1, 256>}, {transform_indices = @transform_2, window_bounds = array<i64: 2, 256>}]} {
    %c0 = arith.constant 0 : index
    %c0_0 = arith.constant 0 : index
    %0 = vector.load %arg3[%c0, %c0_0] : memref<2x256xf32, #tpu.memory_space<vmem>>, vector<2x256xf32>
    %c0_1 = arith.constant 0 : index
    %c0_2 = arith.constant 0 : index
    %1 = vector.load %arg4[%c0_1, %c0_2] : memref<1x256xf32, #tpu.memory_space<vmem>>, vector<1x256xf32>
    %2 = vector.broadcast %1 : vector<1x256xf32> to vector<2x256xf32>
    %3 = arith.addf %0, %2 : vector<2x256xf32>
    %c0_3 = arith.constant 0 : index
    %c0_4 = arith.constant 0 : index
    %4 = vector.load %arg5[%c0_3, %c0_4] : memref<2x256xf32, #tpu.memory_space<vmem>>, vector<2x256xf32>
    tpu.vector_store %arg5[%c0_3, %c0_4], %3 {strides = array<i32>} : memref<2x256xf32, #tpu.memory_space<vmem>>, vector<2x256xf32>,
    return
  }
  func.func @transform_0(%arg0: i32, %arg1: i32, %arg2: memref<1xi32, #tpu.memory_space<smem>>) -> (i32, i32) {
    %c0_i32 = arith.constant 0 : i32
    return %arg0, %arg1 : i32, i32
  }
  func.func @transform_1(%arg0: i32, %arg1: i32, %arg2: memref<1xi32, #tpu.memory_space<smem>>) -> (i32, i32) {
    %c0_i32 = arith.constant 0 : i32
    %c0_i32_0 = arith.constant 0 : i32
    return %c0_i32, %arg1 : i32, i32
  }
  func.func @transform_2(%arg0: i32, %arg1: i32, %arg2: memref<1xi32, #tpu.memory_space<smem>>) -> (i32, i32) {
    %c0_i32 = arith.constant 0 : i32
    return %arg0, %arg1 : i32, i32
  }
}

</mosaic_0001>

<llo_original>
// kernel: tpu_custom_call.1
$region0: #{tpu_custom_call.1}
  #allocation0 [shape = 'u32[]', space=smem, size = 0x4, offset = 0x4, fixed_abs, tag = 'smem constant byte address 0x4 - core index']
  #allocation1 [shape = 'u32[144,128]{1,0:T(1,128)}', space=vmem, size = 0x12000, scoped, tag = 'internal scratch']
  #allocation2 [shape = 's32[1]{0}', space=sflag, size = 0x4, scoped, tag = 'scoped memory for tpu_custom_call.1']
  #allocation3 [shape = 's32[1]{0:T(128)S(6)}', space=smem, size = 0x200, scoped, tag = 'prefetched SMEM operand 0']
  %s0 = inlined_call_operand.<no memory space> [shape: s32[1], index: 0, kind: input, shape index: {}]
  %s1 = inlined_call_operand.hbm [shape: f32[2,256], index: 1, kind: input, shape index: {}]
  %s2 = inlined_call_operand.vmem [shape: f32[1,256], index: 2, kind: input, shape index: {}]
  %s3 = inlined_call_operand.hbm [shape: f32[2,256], index: 3, kind: output, shape index: {}]
  %s4 = sld [smem:[#allocation0]]
  $region22: #{tpu_custom_call.1} parent=0
    _
  %s6 = ssub.s32 1, %s4
  %s7 = scalar_select 0, %s6, %s4
  %8 = sst [smem:[#allocation3]] %s0
  $region1: #{tpu_custom_call.1} parent=0
    #allocation4 [shape = 'u8[2048]{0}', space=vmem, size = 0x800, scoped, tag = 'input window, operand 1, single buffered']
    #allocation5 [shape = 's32[1]{0}', space=sflag, size = 0x4, scoped, tag = 'scoped memory for tpu_custom_call.1']
    #allocation6 [shape = 's32[1]{0}', space=sflag, size = 0x4, scoped, tag = 'scoped memory for tpu_custom_call.1']
    #allocation7 [shape = 'u8[2048]{0}', space=vmem, size = 0x800, scoped, tag = 'output window, operand 0, single buffered']
    %9 = vsyncpa [#allocation5], 0
    %10 = vsyncpa [#allocation6], 0
    // Predicated region
    $region2: #{tpu_custom_call.1} parent=1 // pred_check
      _
    $region3: #{tpu_custom_call.1} parent=1 // pred_check_branch
      %12 = sbr.rel (0) target = $region5
    $region4: #{tpu_custom_call.1} parent=1 // pred_region
      %s14 = ssub.s32 64, 64
      %15 = vsyncadd [#allocation5], %s14
      %s17 = sshll.u32 [#allocation4], 4
      %s18 = int_to_ptr.vmem [resolvable:$true] %s17
      %20 = dma.hbm_to_vmem [thread:$0]  %s1, 64, %s18, [#allocation5]
    $region5: #{tpu_custom_call.1} parent=1 // pred_fallthru
      _
    // Predicated region
    $region6: #{tpu_custom_call.1} parent=1 // pred_check
      _
    $region7: #{tpu_custom_call.1} parent=1 // pred_check_branch
      %22 = sbr.rel (0) target = $region9
    $region8: #{tpu_custom_call.1} parent=1 // pred_region
      _
    $region9: #{tpu_custom_call.1} parent=1 // pred_fallthru
      _
    // Predicated region
    $region10: #{tpu_custom_call.1} parent=1 // pred_check
      _
    $region11: #{tpu_custom_call.1} parent=1 // pred_check_branch
      %24 = sbr.rel (0) target = $region13
    $region12: #{tpu_custom_call.1} parent=1 // pred_region
      %25 = dma.done [#allocation5], 64
    $region13: #{tpu_custom_call.1} parent=1 // pred_fallthru
      _
    %v26 = vld [vmem:[#allocation4] sm:$0xf]
    %v27 = vld [vmem:[%s2] sm:$0x3]
    %v29 = vlaneseq
    %v30 = vshrl.u32 %v29, 7
    %v31 = vsub.s32 0, %v30
    %v32 = vrot.slane %v27, %v31
    %v33 = vlaneseq
    %v34 = vshrl.u32 %v33, 7
    %v35 = vsub.s32 1, %v34
    %v36 = vrot.slane %v27, %v35
    %v37 = vcombine.low %v32, %v36
    %v39 = vunpack.c.l.s4 1983009808
    %v40 = vunpack.c.0.s8 %v39
    %v41 = vlaneseq
    %v42 = vshrl.u32 %v41, 7
    %v43 = vsub.s32 %v40, %v42
    %v44 = vrot.slane %v37, %v43
    %v46 = vadd.f32 %v26, %v44
    %47 = vst [vmem:[#allocation7] sm:$0xf] %v46
    // Predicated region
    $region14: #{tpu_custom_call.1} parent=1 // pred_check
      _
    $region15: #{tpu_custom_call.1} parent=1 // pred_check_branch
      %49 = sbr.rel (0) target = $region17
    $region16: #{tpu_custom_call.1} parent=1 // pred_region
      %s51 = ssub.s32 64, 64
      %52 = vsyncadd [#allocation6], %s51
      %s54 = sshll.u32 [#allocation7], 4
      %s55 = int_to_ptr.vmem [resolvable:$true] %s54
      %57 = dma.vmem_to_hbm [thread:$0]  %s55, 64, %s3, [#allocation6]
    $region17: #{tpu_custom_call.1} parent=1 // pred_fallthru
      _
    // Predicated region
    $region18: #{tpu_custom_call.1} parent=1 // pred_check
      _
    $region19: #{tpu_custom_call.1} parent=1 // pred_check_branch
      %59 = sbr.rel (0) target = $region21
    $region20: #{tpu_custom_call.1} parent=1 // pred_region
      %60 = dma.done [#allocation6], 64
    $region21: #{tpu_custom_call.1} parent=1 // pred_fallthru
      _
    %61 = vsyncpa [#allocation5], 1
    %62 = vsyncpa [#allocation6], 1

</llo_original>
